<compile_context>
chip_gen: v7x
topology: tpu7x:2x2x1
jax: 0.10.0
libtpu: 0.0.40
codegen_flags: <defaults>
</compile_context>

<pallas_src>
import jax
import jax.numpy as jnp
from jax.experimental import pallas as pl
from jax.experimental.pallas import tpu as pltpu


def _rup(a, b):
    return -(-a // b) * b


def mean_agg_kernel(x_ref, nb_ref, wx_ref, wn_ref, out_ref):
    # x_ref:  (tm, D)      nb_ref: (tm, S*D)
    # wx_ref: (D, 2*O)     wn_ref: (S*D, 2*O)   (zero-padded / stacked, see wrapper)
    out = jnp.dot(x_ref[...], wx_ref[...], preferred_element_type=jnp.float32)
    out = out + jnp.dot(nb_ref[...], wn_ref[...], preferred_element_type=jnp.float32)
    # TODO(synk): `activation` is a constructor argument in the PyTorch module;
    # ReLU is the concrete choice here (combine_fn fixed to concat(dim=1)).
    out_ref[...] = jnp.maximum(out, 0.0).astype(out_ref.dtype)


def mean_aggregator(x, neibs, Wx, Wn, *, tm=1024):
    """x: [N, D]; neibs: [N * n_sample, D]; Wx, Wn: [O, D] (torch nn.Linear layout)."""
    N, D = x.shape
    total, D2 = neibs.shape
    assert D2 == D and total % N == 0
    S = total // N
    O = Wx.shape[0]
    dtype = x.dtype
    itemsize = jnp.dtype(dtype).itemsize

    # --- Weight packing -----------------------------------------------------
    # x @ [Wx.T | 0]  +  nb2d @ [0 | stack_S(Wn.T / S)]
    #   == concat([x @ Wx.T, mean_s(neibs) @ Wn.T], axis=1)
    Wx_p = jnp.zeros((D, 2 * O), dtype).at[:, :O].set(Wx.T.astype(dtype))
    Wn_stack = (
        jnp.zeros((S * D, 2 * O), dtype)
        .at[:, O:]
        .set(jnp.tile(Wn.T / S, (S, 1)).astype(dtype))
    )

    # Free row-major 2-D view: each row holds its S neighbor rows back-to-back.
    nb2d = neibs.reshape(N, S * D)

    # --- Tile sizing (layout-aware VMEM accounting) -------------------------
    vmem_limit = 48 * 1024 * 1024  # safe on v7x (64 MiB physical per TC)
    # Resident weight buffers (count double-buffered to be safe).
    w_bytes = 2 * (
        _rup(D, 8) * _rup(2 * O, 128) + _rup(S * D, 8) * _rup(2 * O, 128)
    ) * itemsize
    # Per-row VMEM bytes of the pipelined tiles, with lane padding to 128.
    per_row = (_rup(D, 128) + _rup(S * D, 128) + _rup(2 * O, 128)) * itemsize
    tile_budget = max(per_row * 16, vmem_limit - w_bytes - (4 << 20))
    max_tm = max(8, (tile_budget // (2 * per_row)) // 8 * 8)  # x2: double-buffered

    tm = int(min(tm, max_tm, _rup(N, 8)))
    tm = max(8, (tm // 8) * 8)
    # Give the megacore ("parallel") axis at least two steps when N allows it.
    if tm >= N and N > 8:
        tm = max(8, _rup(-(-N // 2), 8))
    grid_m = pl.cdiv(N, tm)

    out = pl.pallas_call(
        mean_agg_kernel,
        out_shape=jax.ShapeDtypeStruct((N, 2 * O), dtype),
        grid_spec=pl.GridSpec(
            grid=(grid_m,),
            in_specs=[
                pl.BlockSpec((tm, D), lambda i: (i, 0)),          # x row tile
                pl.BlockSpec((tm, S * D), lambda i: (i, 0)),      # neibs row tile (2-D view)
                pl.BlockSpec((D, 2 * O), lambda i: (0, 0)),       # padded Wx.T (resident)
                pl.BlockSpec((S * D, 2 * O), lambda i: (0, 0)),   # stacked Wn.T/S (resident)
            ],
            out_specs=pl.BlockSpec((tm, 2 * O), lambda i: (i, 0)),
        ),
        compiler_params=pltpu.CompilerParams(
            dimension_semantics=("parallel",),
            vmem_limit_bytes=vmem_limit,
        ),
    )(x, nb2d, Wx_p, Wn_stack)

    return out


if __name__ == "__main__":
    input_dim = 16
    output_dim = 32
    num_nodes = 50          # deliberately NOT a multiple of 8/tm -> exercises boundary blocks
    n_sample = 4

    key = jax.random.PRNGKey(0)
    k_wx, k_wn, k_x, k_nb = jax.random.split(key, 4)

    # torch nn.Linear(input_dim, output_dim, bias=False) weight layout: (O, D).
    bound = (1.0 / input_dim) ** 0.5
    Wx = jax.random.uniform(k_wx, (output_dim, input_dim), jnp.float32, -bound, bound)
    Wn = jax.random.uniform(k_wn, (output_dim, input_dim), jnp.float32, -bound, bound)

    x = jax.random.normal(k_x, (num_nodes, input_dim), jnp.float32)
    neibs = jax.random.normal(k_nb, (num_nodes * n_sample, input_dim), jnp.float32)

    # Small explicit tile -> multi-step grid with a partial boundary block.
    out_small_tile = jax.block_until_ready(
        mean_aggregator(x, neibs, Wx, Wn, tm=16))
    # Default (large, auto-clamped) tile -> grid_m forced to >= 2 for megacore.
    out_default = jax.block_until_ready(
        mean_aggregator(x, neibs, Wx, Wn))

    # Pure-JAX reference of the module's forward (activation = ReLU).
    agg = neibs.reshape(num_nodes, n_sample, input_dim).mean(axis=1)
    ref = jnp.maximum(jnp.concatenate([x @ Wx.T, agg @ Wn.T], axis=1), 0.0)

    assert out_small_tile.shape == (num_nodes, 2 * output_dim)
    assert out_default.shape == (num_nodes, 2 * output_dim)
    assert jnp.allclose(out_small_tile, ref, atol=1e-4, rtol=1e-4)
    assert jnp.allclose(out_default, ref, atol=1e-4, rtol=1e-4)

    print("KERNEL_OK")
</pallas_src>

<mosaic_0001>
module attributes {stable_mosaic.version = 11 : i64} {
  func.func @mean_agg_kernel(%arg0: i32, %arg1: memref<16x16xf32, #tpu.memory_space<vmem>>, %arg2: memref<16x64xf32, #tpu.memory_space<vmem>>, %arg3: memref<16x64xf32, #tpu.memory_space<vmem>>, %arg4: memref<64x64xf32, #tpu.memory_space<vmem>>, %arg5: memref<16x64xf32, #tpu.memory_space<vmem>>) attributes {dimension_semantics = [#tpu.dimension_semantics<parallel>], iteration_bounds = array<i64: 4>, scalar_prefetch = 0 : i64, scratch_operands = 0 : i64, tpu.core_type = #tpu.core_type<tc>, window_params = [{transform_indices = @transform_0, window_bounds = array<i64: 16, 16>}, {transform_indices = @transform_1, window_bounds = array<i64: 16, 64>}, {pipeline_mode = #tpu.pipeline_mode<synchronous>, transform_indices = @transform_2, window_bounds = array<i64: 16, 64>}, {pipeline_mode = #tpu.pipeline_mode<synchronous>, transform_indices = @transform_3, window_bounds = array<i64: 64, 64>}, {transform_indices = @transform_4, window_bounds = array<i64: 16, 64>}]} {
    %c0 = arith.constant 0 : index
    %c0_0 = arith.constant 0 : index
    %0 = vector.load %arg1[%c0, %c0_0] : memref<16x16xf32, #tpu.memory_space<vmem>>, vector<16x16xf32>
    %c0_1 = arith.constant 0 : index
    %c0_2 = arith.constant 0 : index
    %1 = vector.load %arg3[%c0_1, %c0_2] : memref<16x64xf32, #tpu.memory_space<vmem>>, vector<16x64xf32>
    %cst = arith.constant dense<0.000000e+00> : vector<16x64xf32>
    %2 = tpu.matmul %0, %1, %cst {dimension_numbers = #tpu.dot_dimension_numbers<[1], [0], [0], [1], [0, 0, 1, 1], [], []>} : vector<16x16xf32>, vector<16x64xf32>, vector<16x64xf32> -> vector<16x64xf32>
    %c0_3 = arith.constant 0 : index
    %c0_4 = arith.constant 0 : index
    %3 = vector.load %arg2[%c0_3, %c0_4] : memref<16x64xf32, #tpu.memory_space<vmem>>, vector<16x64xf32>
    %c0_5 = arith.constant 0 : index
    %c0_6 = arith.constant 0 : index
    %4 = vector.load %arg4[%c0_5, %c0_6] : memref<64x64xf32, #tpu.memory_space<vmem>>, vector<64x64xf32>
    %cst_7 = arith.constant dense<0.000000e+00> : vector<16x64xf32>
    %5 = tpu.matmul %3, %4, %cst_7 {dimension_numbers = #tpu.dot_dimension_numbers<[1], [0], [0], [1], [0, 0, 1, 1], [], []>} : vector<16x64xf32>, vector<64x64xf32>, vector<16x64xf32> -> vector<16x64xf32>
    %6 = arith.addf %2, %5 : vector<16x64xf32>
    %cst_8 = arith.constant 0.000000e+00 : f32
    %7 = vector.broadcast %cst_8 : f32 to vector<16x64xf32>
    %8 = arith.maximumf %6, %7 : vector<16x64xf32>
    %c0_9 = arith.constant 0 : index
    %c0_10 = arith.constant 0 : index
    %9 = vector.load %arg5[%c0_9, %c0_10] : memref<16x64xf32, #tpu.memory_space<vmem>>, vector<16x64xf32>
    tpu.vector_store %arg5[%c0_9, %c0_10], %8 {strides = array<i32>} : memref<16x64xf32, #tpu.memory_space<vmem>>, vector<16x64xf32>,
    return
  }
  func.func @transform_0(%arg0: i32) -> (i32, i32) {
    %c0_i32 = arith.constant 0 : i32
    %c0_i32_0 = arith.constant 0 : i32
    return %arg0, %c0_i32 : i32, i32
  }
  func.func @transform_1(%arg0: i32) -> (i32, i32) {
    %c0_i32 = arith.constant 0 : i32
    %c0_i32_0 = arith.constant 0 : i32
    return %arg0, %c0_i32 : i32, i32
  }
  func.func @transform_2(%arg0: i32) -> (i32, i32) {
    %c0_i32 = arith.constant 0 : i32
    %c0_i32_0 = arith.constant 0 : i32
    %c0_i32_1 = arith.constant 0 : i32
    return %c0_i32, %c0_i32_0 : i32, i32
  }
  func.func @transform_3(%arg0: i32) -> (i32, i32) {
    %c0_i32 = arith.constant 0 : i32
    %c0_i32_0 = arith.constant 0 : i32
    %c0_i32_1 = arith.constant 0 : i32
    return %c0_i32, %c0_i32_0 : i32, i32
  }
  func.func @transform_4(%arg0: i32) -> (i32, i32) {
    %c0_i32 = arith.constant 0 : i32
    %c0_i32_0 = arith.constant 0 : i32
    return %arg0, %c0_i32 : i32, i32
  }
}

</mosaic_0001>

<llo_original>
// kernel: tpu_custom_call.1
$region0: #{tpu_custom_call.1}
  #allocation0 [shape = 'u32[]', space=smem, size = 0x4, offset = 0x4, fixed_abs, tag = 'smem constant byte address 0x4 - core index']
  #allocation1 [shape = 'u32[144,128]{1,0:T(1,128)}', space=vmem, size = 0x12000, scoped, tag = 'internal scratch']
  %s0 = inlined_call_operand.vmem [shape: f32[50,16], index: 0, kind: input, shape index: {}]
  %s1 = inlined_call_operand.hbm [shape: f32[50,64], index: 1, kind: input, shape index: {}]
  %s2 = inlined_call_operand.vmem [shape: f32[16,64], index: 2, kind: input, shape index: {}]
  %s3 = inlined_call_operand.vmem [shape: f32[64,64], index: 3, kind: input, shape index: {}]
  %s4 = inlined_call_operand.hbm [shape: f32[50,64], index: 4, kind: output, shape index: {}]
  %s5 = sld [smem:[#allocation0]]
  $region53: #{tpu_custom_call.1} parent=0
    _
  %s7 = ssub.s32 1, %s5
  %s8 = scalar_select 0, %s7, %s5
  $region1: #{tpu_custom_call.1} parent=0
    #allocation2 [shape = 'u8[16384]{0}', space=vmem, size = 0x4000, scoped, tag = 'input window, operand 1']
    #allocation3 [shape = 's32[2]{0}', space=sflag, size = 0x8, scoped, tag = 'scoped memory for tpu_custom_call.1']
    #allocation4 [shape = 's32[2]{0}', space=sflag, size = 0x8, scoped, tag = 'scoped memory for tpu_custom_call.1']
    #allocation5 [shape = 'u8[16384]{0}', space=vmem, size = 0x4000, scoped, tag = 'output window, operand 0']
    %9 = vsyncpa [#allocation3], 0
    %s10 = scalar_lea.sflag [#allocation3], 1
    %11 = vsyncpa %s10, 0
    %12 = vsyncpa [#allocation4], 0
    %s13 = scalar_lea.sflag [#allocation4], 1
    %14 = vsyncpa %s13, 0
    loop: start=0, step=1, limit=6
    $region2: #{tpu_custom_call.1} parent=1 // loop_pre_header
      _
    $region3: #{tpu_custom_call.1} parent=1 // loop_header
      %s16 = sphi 0, %s20
      %p17 = scmp.ge.s32.totalorder %s16, 6
      %s26 = sphi 0, %s28
      %s29 = sphi 0, %s26
      %s30 = sphi 0, %s29
      %s46 = sphi 0, %s30
      %s52 = sphi 0, %s54
      %s55 = sphi 0, %s52
      %s56 = sphi 0, %s55
      %s72 = sphi 0, %s56
      %s76 = sphi 0, %s76
      %s78 = sphi 0, %s76
      %s79 = sphi 0, %s78
      %s93 = sphi 0, %s79
      %s97 = sphi 0, %s97
      %s99 = sphi 0, %s97
      %s100 = sphi 0, %s99
      %s114 = sphi 0, %s100
      %s120 = sphi 0, %s122
      %s123 = sphi 0, %s120
      %s124 = sphi 0, %s123
      %s140 = sphi 0, %s124
    $region4: #{tpu_custom_call.1} parent=1 // loop_header_branch
      %19 = sbr.rel (%p17) target = $region8
    $region5: #{tpu_custom_call.1} parent=1 // loop_body
      %s21 = ssub.s32 %s16, 1
      %s22 = ssub.s32 %s16, 2
      %s23 = sadd.s32 %s16, 1
      %s24 = ssub.s32 %s16, %s23
      %p25 = scmp.eq.s32.totalorder %s24, 0
      %s27 = sadd.s32 %s26, 1
      %s28 = scalar_select %p25, %s26, %s27
      %p31 = pneg %p25
      %p32 = scmp.eq.s32.totalorder %s16, 3
      %p33 = por %p31, %p32
      %p34 = scmp.ne.s32.totalorder %s26, %s29
      %p35 = scmp.eq.s32.totalorder %s16, 0
      %p36 = por %p34, %p35
      %p37 = scmp.ne.s32.totalorder %s26, %s29
      %p38 = scmp.eq.s32.totalorder %s21, 3
      %p39 = por %p37, %p38
      %p40 = scmp.ne.s32.totalorder %s29, %s30
      %p41 = scmp.eq.s32.totalorder %s21, 0
      %p42 = por %p40, %p41
      %p43 = scmp.ne.s32.totalorder %s29, %s30
      %p44 = scmp.eq.s32.totalorder %s22, 3
      %p45 = por %p43, %p44
      %p47 = scmp.ne.s32.totalorder %s30, %s46
      %p48 = scmp.eq.s32.totalorder %s22, 0
      %p49 = por %p47, %p48
      %s50 = ssub.s32 %s16, %s23
      %p51 = scmp.eq.s32.totalorder %s50, 0
      %s53 = sadd.s32 %s52, 1
      %s54 = scalar_select %p51, %s52, %s53
      %p57 = pneg %p51
      %p58 = scmp.eq.s32.totalorder %s16, 3
      %p59 = por %p57, %p58
      %p60 = scmp.ne.s32.totalorder %s52, %s55
      %p61 = scmp.eq.s32.totalorder %s16, 0
      %p62 = por %p60, %p61
      %p63 = scmp.ne.s32.totalorder %s52, %s55
      %p64 = scmp.eq.s32.totalorder %s21, 3
      %p65 = por %p63, %p64
      %p66 = scmp.ne.s32.totalorder %s55, %s56
      %p67 = scmp.eq.s32.totalorder %s21, 0
      %p68 = por %p66, %p67
      %p69 = scmp.ne.s32.totalorder %s55, %s56
      %p70 = scmp.eq.s32.totalorder %s22, 3
      %p71 = por %p69, %p70
      %p73 = scmp.ne.s32.totalorder %s56, %s72
      %p74 = scmp.eq.s32.totalorder %s22, 0
      %p75 = por %p73, %p74
      %s77 = sadd.s32 %s76, 1
      %p80 = scmp.eq.s32.totalorder %s16, 3
      %p81 = scmp.ne.s32.totalorder %s76, %s78
      %p82 = scmp.eq.s32.totalorder %s16, 0
      %p83 = por %p81, %p82
      %p84 = scmp.ne.s32.totalorder %s76, %s78
      %p85 = scmp.eq.s32.totalorder %s21, 3
      %p86 = por %p84, %p85
      %p87 = scmp.ne.s32.totalorder %s78, %s79
      %p88 = scmp.eq.s32.totalorder %s21, 0
      %p89 = por %p87, %p88
      %p90 = scmp.ne.s32.totalorder %s78, %s79
      %p91 = scmp.eq.s32.totalorder %s22, 3
      %p92 = por %p90, %p91
      %p94 = scmp.ne.s32.totalorder %s79, %s93
      %p95 = scmp.eq.s32.totalorder %s22, 0
      %p96 = por %p94, %p95
      %s98 = sadd.s32 %s97, 1
      %p101 = scmp.eq.s32.totalorder %s16, 3
      %p102 = scmp.ne.s32.totalorder %s97, %s99
      %p103 = scmp.eq.s32.totalorder %s16, 0
      %p104 = por %p102, %p103
      %p105 = scmp.ne.s32.totalorder %s97, %s99
      %p106 = scmp.eq.s32.totalorder %s21, 3
      %p107 = por %p105, %p106
      %p108 = scmp.ne.s32.totalorder %s99, %s100
      %p109 = scmp.eq.s32.totalorder %s21, 0
      %p110 = por %p108, %p109
      %p111 = scmp.ne.s32.totalorder %s99, %s100
      %p112 = scmp.eq.s32.totalorder %s22, 3
      %p113 = por %p111, %p112
      %p115 = scmp.ne.s32.totalorder %s100, %s114
      %p116 = scmp.eq.s32.totalorder %s22, 0
      %p117 = por %p115, %p116
      %s118 = ssub.s32 %s16, %s23
      %p119 = scmp.eq.s32.totalorder %s118, 0
      %s121 = sadd.s32 %s120, 1
      %s122 = scalar_select %p119, %s120, %s121
      %p125 = pneg %p119
      %p126 = scmp.eq.s32.totalorder %s16, 3
      %p127 = por %p125, %p126
      %p128 = scmp.ne.s32.totalorder %s120, %s123
      %p129 = scmp.eq.s32.totalorder %s16, 0
      %p130 = por %p128, %p129
      %p131 = scmp.ne.s32.totalorder %s120, %s123
      %p132 = scmp.eq.s32.totalorder %s21, 3
      %p133 = por %p131, %p132
      %p134 = scmp.ne.s32.totalorder %s123, %s124
      %p135 = scmp.eq.s32.totalorder %s21, 0
      %p136 = por %p134, %p135
      %p137 = scmp.ne.s32.totalorder %s123, %s124
      %p138 = scmp.eq.s32.totalorder %s22, 3
      %p139 = por %p137, %p138
      %p141 = scmp.ne.s32.totalorder %s124, %s140
      %p142 = scmp.eq.s32.totalorder %s22, 0
      %p143 = por %p141, %p142
      %p144 = scmp.le.s32.totalorder 1, %s16
      %p145 = scmp.lt.s32.totalorder %s16, 5
      %p146 = pnand %p144, %p145
      %p147 = pneg %p146
      // Predicated region
      $region9: #{tpu_custom_call.1} parent=5 // pred_check
        _
      $region10: #{tpu_custom_call.1} parent=5 // pred_check_branch
        %149 = sbr.rel (%p146) target = $region12
      $region11: #{tpu_custom_call.1} parent=5 // pred_region
        %s150 = ssub.s32 %s16, 1
        // Predicated region
        $region13: #{tpu_custom_call.1} parent=11 // pred_check
          %p151 = pneg %p89
        $region14: #{tpu_custom_call.1} parent=11 // pred_check_branch
          %153 = sbr.rel (%p151) target = $region16
        $region15: #{tpu_custom_call.1} parent=11 // pred_region
          _
        $region16: #{tpu_custom_call.1} parent=11 // pred_fallthru
          _
        // Predicated region
        $region17: #{tpu_custom_call.1} parent=11 // pred_check
          %p154 = pneg %p110
        $region18: #{tpu_custom_call.1} parent=11 // pred_check_branch
          %156 = sbr.rel (%p154) target = $region20
        $region19: #{tpu_custom_call.1} parent=11 // pred_region
          _
        $region20: #{tpu_custom_call.1} parent=11 // pred_fallthru
          _
      $region12: #{tpu_custom_call.1} parent=5 // pred_fallthru
        _
      %p157 = scmp.lt.s32.totalorder %s16, 4
      // Predicated region
      $region21: #{tpu_custom_call.1} parent=5 // pred_check
        %p158 = pneg %p157
      $region22: #{tpu_custom_call.1} parent=5 // pred_check_branch
        %160 = sbr.rel (%p158) target = $region24
      $region23: #{tpu_custom_call.1} parent=5 // pred_region
        // Predicated region
        $region25: #{tpu_custom_call.1} parent=23 // pred_check
          %p161 = pneg %p36
        $region26: #{tpu_custom_call.1} parent=23 // pred_check_branch
          %163 = sbr.rel (%p161) target = $region28
        $region27: #{tpu_custom_call.1} parent=23 // pred_region
          %s164 = smul.u32 2, %s16
          %s165 = ssub.s32 7, %s164
          %p166 = scmp.lt.s32.totalorder %s165, 2
          %s167 = scalar_select %p166, %s165, 2
          %s168 = smul.u32 128, %s167
          %p169 = scmp.lt.s32.totalorder %s164, 6
          %s170 = scalar_select %p169, %s164, 6
          %s171 = smul.addr %s170, 8
          %s172 = scalar_lea.vmem %s0, %s171
          %s173 = smul.u32 2, %s16
          %s174 = ssub.s32 7, %s173
          %p175 = scmp.lt.s32.totalorder %s174, 2
          %s176 = scalar_select %p175, %s174, 2
          %s177 = smul.u32 128, %s176
        $region28: #{tpu_custom_call.1} parent=23 // pred_fallthru
          _
        // Predicated region
        $region29: #{tpu_custom_call.1} parent=23 // pred_check
          %p178 = pneg %p62
        $region30: #{tpu_custom_call.1} parent=23 // pred_check_branch
          %180 = sbr.rel (%p178) target = $region32
        $region31: #{tpu_custom_call.1} parent=23 // pred_region
          %s181 = sand.u32 %s52, 1
          %s182 = scalar_lea.sflag [#allocation3], %s181
          %s183 = sand.u32 %s52, 1
          %s184 = smul.addr %s183, 16
          %s185 = scalar_lea.vmem [#allocation2], %s184
          %s186 = smul.u32 2, %s16
          %s187 = ssub.s32 7, %s186
          %p188 = scmp.lt.s32.totalorder %s187, 2
          %s189 = scalar_select %p188, %s187, 2
          %s190 = smul.u32 128, %s189
          %s192 = ssub.s32 256, %s190
          %193 = vsyncadd %s182, %s192
          %p194 = scmp.ne.s32.totalorder 0, %s190
          %s195 = smul.addr %s186, 128
          %s196 = scalar_lea.hbm %s1, %s195
          %s197 = smul.u32 8, %s189
          %s198 = sshll.u32 %s185, 4
          %s199 = int_to_ptr.vmem [resolvable:$true] %s198
          %s200 = sshll.u32 %s197, 4
          %204 = dma.hbm_to_vmem [thread:$0]  (%p194), %s196, %s200, %s199, %s182, 128, 128, 8
        $region32: #{tpu_custom_call.1} parent=23 // pred_fallthru
          _
      $region24: #{tpu_custom_call.1} parent=5 // pred_fallthru
        _
      %p205 = scmp.le.s32.totalorder 1, %s16
      %p206 = scmp.lt.s32.totalorder %s16, 5
      %p207 = pnand %p205, %p206
      %p208 = pneg %p207
      // Predicated region
      $region33: #{tpu_custom_call.1} parent=5 // pred_check
        _
      $region34: #{tpu_custom_call.1} parent=5 // pred_check_branch
        %210 = sbr.rel (%p207) target = $region36
      $region35: #{tpu_custom_call.1} parent=5 // pred_region
        %s211 = ssub.s32 %s16, 1
        %s212 = sand.u32 %s55, 1
        %s213 = scalar_lea.sflag [#allocation3], %s212
        %s214 = sand.u32 %s55, 1
        %s215 = smul.addr %s214, 16
        %s216 = scalar_lea.vmem [#allocation2], %s215
        // Predicated region
        $region37: #{tpu_custom_call.1} parent=35 // pred_check
          %p217 = pneg %p68
        $region38: #{tpu_custom_call.1} parent=35 // pred_check_branch
          %219 = sbr.rel (%p217) target = $region40
        $region39: #{tpu_custom_call.1} parent=35 // pred_region
          %220 = dma.done %s213, 256
        $region40: #{tpu_custom_call.1} parent=35 // pred_fallthru
          _
        %s221 = smul.u32 2, %s21
        %s222 = ssub.s32 7, %s221
        %p223 = scmp.lt.s32.totalorder %s222, 2
        %s224 = scalar_select %p223, %s222, 2
        %s225 = smul.u32 128, %s224
        %p226 = scmp.lt.s32.totalorder %s221, 6
        %s227 = scalar_select %p226, %s221, 6
        %s228 = smul.addr %s227, 8
        %s229 = scalar_lea.vmem %s0, %s228
        %p230 = pneg %p42
        %p231 = pneg %p39
        %s232 = sand.u32 %s55, 1
        %s233 = scalar_lea.sflag [#allocation3], %s232
        %s234 = sand.u32 %s55, 1
        %s235 = smul.addr %s234, 16
        %s236 = scalar_lea.vmem [#allocation2], %s235
        %p237 = pneg %p68
        %p238 = pneg %p65
        %p239 = pneg %p89
        %p240 = pneg %p86
        %p241 = pneg %p110
        %p242 = pneg %p107
        %p243 = pneg %p136
        %p244 = pneg %p133
        %s245 = sand.u32 %s123, 1
        %s246 = scalar_lea.sflag [#allocation4], %s245
        %s247 = sand.u32 %s123, 1
        %s248 = smul.addr %s247, 16
        %s249 = scalar_lea.vmem [#allocation5], %s248
        %s250 = smul.u32 2, %s21
        %s251 = ssub.s32 7, %s250
        %p252 = scmp.lt.s32.totalorder %s251, 2
        %s253 = scalar_select %p252, %s251, 2
        %s254 = smul.u32 128, %s253
        %p255 = scmp.lt.s32.totalorder %s250, 6
        %s256 = scalar_select %p255, %s250, 6
        %s257 = smul.addr %s256, 8
        %s258 = scalar_lea.vmem %s0, %s257
        %s259 = smul.u32 2, %s21
        %s260 = ssub.s32 7, %s259
        %p261 = scmp.lt.s32.totalorder %s260, 2
        %s262 = scalar_select %p261, %s260, 2
        %s263 = smul.u32 128, %s262
        %s264 = smul.u32 2, %s21
        %s265 = ssub.s32 7, %s264
        %p266 = scmp.lt.s32.totalorder %s265, 2
        %s267 = scalar_select %p266, %s265, 2
        %s268 = smul.u32 128, %s267
        %s269 = smul.u32 2, %s21
        %s270 = ssub.s32 7, %s269
        %p271 = scmp.lt.s32.totalorder %s270, 2
        %s272 = scalar_select %p271, %s270, 2
        %s273 = smul.u32 128, %s272
        %v274 = vld [vmem:[%s258] sm:$0xff]
        %v275 = vld [vmem:[%s258 + $0x8] sm:$0xff]
        %v276 = vld [vmem:[%s2] sm:$0xff]
        %v277 = vld [vmem:[%s2 + $0x8] sm:$0xff]
        %v278 = vld [vmem:[%s216] sm:$0xff]
        %v279 = vld [vmem:[%s216 + $0x8] sm:$0xff]
        %v280 = vld [vmem:[%s3] sm:$0xff]
        %v281 = vld [vmem:[%s3 + $0x8] sm:$0xff]
        %v282 = vld [vmem:[%s3 + $0x10] sm:$0xff]
        %v283 = vld [vmem:[%s3 + $0x18] sm:$0xff]
        %v284 = vld [vmem:[%s3 + $0x20] sm:$0xff]
        %v285 = vld [vmem:[%s3 + $0x28] sm:$0xff]
        %v286 = vld [vmem:[%s3 + $0x30] sm:$0xff]
        %v287 = vld [vmem:[%s3 + $0x38] sm:$0xff]
        %vm288 = vcmask 523264
        %v290 = vsel %vm288, %v278, 0
        %v293 = vsel %vm288, %v279, 0
        %295 = vmatprep.subr.mxu0 0.0
        %296 = vmatpush1.msra.mxu0 %v280
        %297 = vmatprep.subr.mxu0 0.0
        %298 = vmatpush1.msra.mxu0 %v281
        %299 = vmatprep.subr.mxu0 0.0
        %300 = vmatpush1.msra.mxu0 %v282
        %301 = vmatprep.subr.mxu0 0.0
        %302 = vmatpush1.msra.mxu0 %v283
        %303 = vmatprep.subr.mxu0 0.0
        %304 = vmatpush1.msra.mxu0 %v284
        %305 = vmatprep.subr.mxu0 0.0
        %306 = vmatpush1.msra.mxu0 %v285
        %307 = vmatprep.subr.mxu0 0.0
        %308 = vmatpush1.msra.mxu0 %v286
        %309 = vmatprep.subr.mxu0 0.0
        %310 = vmatpush1.msra.mxu0 %v287
        %311 = vmatprep.subr.mxu0 0.0
        %312 = vmatpush1.msra.mxu0 0.0
        %313 = vmatprep.subr.mxu0 0.0
        %314 = vmatpush1.msra.mxu0 0.0
        %315 = vmatprep.subr.mxu0 0.0
        %316 = vmatpush1.msra.mxu0 0.0
        %317 = vmatprep.subr.mxu0 0.0
        %318 = vmatpush1.msra.mxu0 0.0
        %319 = vmatprep.subr.mxu0 0.0
        %320 = vmatpush1.msra.mxu0 0.0
        %321 = vmatprep.subr.mxu0 0.0
        %322 = vmatpush1.msra.mxu0 0.0
        %323 = vmatprep.subr.mxu0 0.0
        %324 = vmatpush1.msra.mxu0 0.0
        %325 = vmatprep.subr.mxu0 0.0
        %326 = vmatpush1.msra.mxu0 0.0
        %327 = vmatprep.subr.mxu0 0.0
        %328 = vmatpush1.msra.mxu0 0.0
        %329 = vmatprep.subr.mxu0 0.0
        %330 = vmatpush1.msra.mxu0 0.0
        %331 = vmatprep.subr.mxu0 0.0
        %332 = vmatpush1.msra.mxu0 0.0
        %333 = vmatprep.subr.mxu0 0.0
        %334 = vmatpush1.msra.mxu0 0.0
        %335 = vmatprep.subr.mxu0 0.0
        %336 = vmatpush1.msra.mxu0 0.0
        %337 = vmatprep.subr.mxu0 0.0
        %338 = vmatpush1.msra.mxu0 0.0
        %339 = vmatprep.subr.mxu0 0.0
        %340 = vmatpush1.msra.mxu0 0.0
        %341 = vmatprep.subr.mxu0 0.0
        %342 = vmatpush1.msra.mxu0 0.0
        %343 = vmatprep.subr.mxu0 0.0
        %344 = vmatpush1.msra.mxu0 0.0
        %345 = vmatprep.subr.mxu0 0.0
        %346 = vmatpush1.msra.mxu0 0.0
        %347 = vmatprep.subr.mxu0 0.0
        %348 = vmatpush1.msra.mxu0 0.0
        %349 = vmatprep.subr.mxu0 0.0
        %350 = vmatpush1.msra.mxu0 0.0
        %351 = vmatprep.subr.mxu0 0.0
        %352 = vmatpush1.msra.mxu0 0.0
        %353 = vmatprep.subr.mxu0 0.0
        %354 = vmatpush1.msra.mxu0 0.0
        %355 = vmatprep.subr.mxu0 0.0
        %356 = vmatpush1.msra.mxu0 0.0
        %357 = vmatprep.subr.mxu0 0.0
        %358 = vmatpush1.msra.mxu0 0.0
        %359 = vmatprep.mubr.f32.mxu0 0.0
        %360 = vmatmul.mubr.f32.gmra.mrb[0].mxu0 %v290
        %v361 = vpop.f32.mrb[0].mxu0
        %v362 = vadd.f32 0.0, %v361
        %v363 = vpop.f32.mrb[0].mxu0
        %364 = vmatprep.mubr.f32.mxu0 0.0
        %365 = vmatmul.mubr.f32.gmra.mrb[0].mxu0 %v293
        %v366 = vpop.f32.mrb[0].mxu0
        %v367 = vadd.f32 0.0, %v366
        %v368 = vpop.f32.mrb[0].mxu0
        %369 = vdwg.mxu0
        %vm370 = vcmask 130048
        %v372 = vsel %vm370, %v274, 0
        %v375 = vsel %vm370, %v275, 0
        %377 = vmatprep.subr.mxu0 0.0
        %378 = vmatpush1.msra.mxu0 %v276
        %379 = vmatprep.subr.mxu0 0.0
        %380 = vmatpush1.msra.mxu0 %v277
        %381 = vmatprep.subr.mxu0 0.0
        %382 = vmatpush1.msra.mxu0 0.0
        %383 = vmatprep.subr.mxu0 0.0
        %384 = vmatpush1.msra.mxu0 0.0
        %385 = vmatprep.subr.mxu0 0.0
        %386 = vmatpush1.msra.mxu0 0.0
        %387 = vmatprep.subr.mxu0 0.0
        %388 = vmatpush1.msra.mxu0 0.0
        %389 = vmatprep.subr.mxu0 0.0
        %390 = vmatpush1.msra.mxu0 0.0
        %391 = vmatprep.subr.mxu0 0.0
        %392 = vmatpush1.msra.mxu0 0.0
        %393 = vmatprep.subr.mxu0 0.0
        %394 = vmatpush1.msra.mxu0 0.0
        %395 = vmatprep.subr.mxu0 0.0
        %396 = vmatpush1.msra.mxu0 0.0
        %397 = vmatprep.subr.mxu0 0.0
        %398 = vmatpush1.msra.mxu0 0.0
        %399 = vmatprep.subr.mxu0 0.0
        %400 = vmatpush1.msra.mxu0 0.0
        %401 = vmatprep.subr.mxu0 0.0
        %402 = vmatpush1.msra.mxu0 0.0
        %403 = vmatprep.subr.mxu0 0.0
        %404 = vmatpush1.msra.mxu0 0.0
        %405 = vmatprep.subr.mxu0 0.0
        %406 = vmatpush1.msra.mxu0 0.0
        %407 = vmatprep.subr.mxu0 0.0
        %408 = vmatpush1.msra.mxu0 0.0
        %409 = vmatprep.subr.mxu0 0.0
        %410 = vmatpush1.msra.mxu0 0.0
        %411 = vmatprep.subr.mxu0 0.0
        %412 = vmatpush1.msra.mxu0 0.0
        %413 = vmatprep.subr.mxu0 0.0
        %414 = vmatpush1.msra.mxu0 0.0
        %415 = vmatprep.subr.mxu0 0.0
        %416 = vmatpush1.msra.mxu0 0.0
        %417 = vmatprep.subr.mxu0 0.0
        %418 = vmatpush1.msra.mxu0 0.0
        %419 = vmatprep.subr.mxu0 0.0
        %420 = vmatpush1.msra.mxu0 0.0
        %421 = vmatprep.subr.mxu0 0.0
        %422 = vmatpush1.msra.mxu0 0.0
        %423 = vmatprep.subr.mxu0 0.0
        %424 = vmatpush1.msra.mxu0 0.0
        %425 = vmatprep.subr.mxu0 0.0
        %426 = vmatpush1.msra.mxu0 0.0
        %427 = vmatprep.subr.mxu0 0.0
        %428 = vmatpush1.msra.mxu0 0.0
        %429 = vmatprep.subr.mxu0 0.0
        %430 = vmatpush1.msra.mxu0 0.0
        %431 = vmatprep.subr.mxu0 0.0
        %432 = vmatpush1.msra.mxu0 0.0
        %433 = vmatprep.subr.mxu0 0.0
        %434 = vmatpush1.msra.mxu0 0.0
        %435 = vmatprep.subr.mxu0 0.0
        %436 = vmatpush1.msra.mxu0 0.0
        %437 = vmatprep.subr.mxu0 0.0
        %438 = vmatpush1.msra.mxu0 0.0
        %439 = vmatprep.subr.mxu0 0.0
        %440 = vmatpush1.msra.mxu0 0.0
        %441 = vmatprep.mubr.f32.mxu0 0.0
        %442 = vmatmul.mubr.f32.gmra.mrb[0].mxu0 %v372
        %v443 = vpop.f32.mrb[0].mxu0
        %v444 = vadd.f32 %v362, %v443
        %v445 = vpop.f32.mrb[0].mxu0
        %446 = vmatprep.mubr.f32.mxu0 0.0
        %447 = vmatmul.mubr.f32.gmra.mrb[0].mxu0 %v375
        %v448 = vpop.f32.mrb[0].mxu0
        %v449 = vadd.f32 %v367, %v448
        %v450 = vpop.f32.mrb[0].mxu0
        %451 = vdwg.mxu0
        %v452 = vmax.f32 %v444, 0.0
        %v453 = vmax.f32 %v449, 0.0
        %454 = vst.msk [vmem:[%s249] sm:$0xff] %vm288, %v452
        %455 = vst.msk [vmem:[%s249 + $0x8] sm:$0xff] %vm288, %v453
        %s456 = sand.u32 %s123, 1
        %s457 = scalar_lea.sflag [#allocation4], %s456
        %s458 = sand.u32 %s123, 1
        %s459 = smul.addr %s458, 16
        %s460 = scalar_lea.vmem [#allocation5], %s459
        // Predicated region
        $region41: #{tpu_custom_call.1} parent=35 // pred_check
          %p461 = pneg %p133
        $region42: #{tpu_custom_call.1} parent=35 // pred_check_branch
          %463 = sbr.rel (%p461) target = $region44
        $region43: #{tpu_custom_call.1} parent=35 // pred_region
          %s464 = smul.u32 2, %s21
          %s465 = ssub.s32 7, %s464
          %p466 = scmp.lt.s32.totalorder %s465, 2
          %s467 = scalar_select %p466, %s465, 2
          %s468 = smul.u32 128, %s467
          %s470 = ssub.s32 256, %s468
          %471 = vsyncadd %s457, %s470
          %p472 = scmp.ne.s32.totalorder 0, %s468
          %s473 = smul.addr %s464, 128
          %s474 = scalar_lea.hbm %s4, %s473
          %s475 = smul.u32 8, %s467
          %s476 = sshll.u32 %s460, 4
          %s477 = int_to_ptr.vmem [resolvable:$true] %s476
          %s478 = sshll.u32 %s475, 4
          %482 = dma.vmem_to_hbm [thread:$0]  (%p472), %s477, %s478, %s474, %s457, 128, 128, 8
        $region44: #{tpu_custom_call.1} parent=35 // pred_fallthru
          _
      $region36: #{tpu_custom_call.1} parent=5 // pred_fallthru
        _
      %p483 = scmp.le.s32.totalorder 2, %s16
      // Predicated region
      $region45: #{tpu_custom_call.1} parent=5 // pred_check
        %p484 = pneg %p483
      $region46: #{tpu_custom_call.1} parent=5 // pred_check_branch
        %486 = sbr.rel (%p484) target = $region48
      $region47: #{tpu_custom_call.1} parent=5 // pred_region
        %s487 = ssub.s32 %s16, 2
        // Predicated region
        $region49: #{tpu_custom_call.1} parent=47 // pred_check
          %p488 = pneg %p139
        $region50: #{tpu_custom_call.1} parent=47 // pred_check_branch
          %490 = sbr.rel (%p488) target = $region52
        $region51: #{tpu_custom_call.1} parent=47 // pred_region
          %s491 = sand.u32 %s124, 1
          %s492 = scalar_lea.sflag [#allocation4], %s491
          %s493 = sand.u32 %s124, 1
          %s494 = smul.addr %s493, 16
          %s495 = scalar_lea.vmem [#allocation5], %s494
          %496 = dma.done %s492, 256
        $region52: #{tpu_custom_call.1} parent=47 // pred_fallthru
          _
      $region48: #{tpu_custom_call.1} parent=5 // pred_fallthru
        _
    $region6: #{tpu_custom_call.1} parent=1 // loop_footer
      %s20 = sadd.s32 1, %s16
    $region7: #{tpu_custom_call.1} parent=1 // loop_footer_branch
      %15 = sbr.rel target = $region3
    $region8: #{tpu_custom_call.1} parent=1 // loop_exit
      _
    %497 = vsyncpa [#allocation3], 1
    %s498 = scalar_lea.sflag [#allocation3], 1
    %499 = vsyncpa %s498, 1
    %500 = vsyncpa [#allocation4], 1
    %s501 = scalar_lea.sflag [#allocation4], 1
    %502 = vsyncpa %s501, 1

</llo_original>
